<compile_context>
chip_gen: v6e
topology: v6e:2x2x1
jax: 0.10.0
libtpu: 0.0.40
codegen_flags: <defaults>
</compile_context>

<pallas_src>
import jax
import jax.numpy as jnp
from jax.experimental import pallas as pl
from jax.experimental.pallas import tpu as pltpu


# ---------------------------------------------------------------------------
# Kernel: fused 4-layer MLP on one (tb, 784) batch tile.  Weights are small,
# lane-dense (output dims padded to 128) and resident via constant-index
# BlockSpecs; every dot accumulates in f32 on the MXU.
# ---------------------------------------------------------------------------
def mlp_kernel(x_ref,
               w1_ref, b1_ref,
               w2_ref, b2_ref,
               w3_ref, b3_ref,
               w4_ref, b4_ref,
               o_ref):
    x = x_ref[...]

    h = jnp.dot(x, w1_ref[...], preferred_element_type=jnp.float32) + b1_ref[...]
    h = jnp.maximum(h, 0.0)

    h = jnp.dot(h, w2_ref[...], preferred_element_type=jnp.float32) + b2_ref[...]
    h = jnp.maximum(h, 0.0)

    h = jnp.dot(h, w3_ref[...], preferred_element_type=jnp.float32) + b3_ref[...]
    h = jnp.maximum(h, 0.0)

    out = jnp.dot(h, w4_ref[...], preferred_element_type=jnp.float32) + b4_ref[...]
    o_ref[...] = out.astype(o_ref.dtype)


# ---------------------------------------------------------------------------
# Helpers.
# ---------------------------------------------------------------------------
def _round_up(n, m):
    return ((n + m - 1) // m) * m


def _pad2d(a, rows, cols):
    r, c = a.shape
    if r == rows and c == cols:
        return a
    return jnp.pad(a, ((0, rows - r), (0, cols - c)))


def _vmem_capacity_bytes():
    try:
        return int(pltpu.get_tpu_info().vmem_capacity_bytes)
    except Exception:
        return 64 << 20  # conservative fallback (v7x per-TensorCore VMEM)


def _choose_batch_tile(B, requested, vmem_cap):
    if requested is None:
        # v7x (64 MiB VMEM/TC, ~3.2 TB/s HBM) wants bigger tiles to amortize the
        # ~0.35us per-grid-step overhead; 2048 is near roofline on v5e/v6e.
        requested = 4096 if vmem_cap <= (64 << 20) else 2048
    tb = max(8, min(_round_up(requested, 8), _round_up(B, 8)))
    # Keep at least 2 grid steps when B allows it, so the "parallel" batch axis
    # can be sharded across both v7x TensorCores and the pipeline has overlap.
    if B > 8:
        tb = min(tb, max(8, _round_up(pl.cdiv(B, 2), 8)))
    return tb


# ---------------------------------------------------------------------------
# One-time parameter preparation (cache the result; do NOT call per forward).
# Weights are (in, out); only output columns are padded to 128 lanes.  All
# padding is strictly zeros -> results are numerically exact.
# ---------------------------------------------------------------------------
def prepare_params(params):
    padded = []
    for name in ("layer1", "layer2", "layer3", "out_layer"):
        w, b = params[name]
        fan_in, fan_out = w.shape
        rows = fan_in if name == "layer1" else _round_up(fan_in, 128)  # keep 784 unpadded
        cols = _round_up(fan_out, 128)
        padded.append(_pad2d(w, rows, cols))
        padded.append(_pad2d(b.reshape(1, -1), 1, cols))
    return tuple(padded)


# ---------------------------------------------------------------------------
# Forward: no input padding, ragged batch handled by a partial last block.
# ---------------------------------------------------------------------------
def _mlp_forward_impl(x, prepared, *, out_features=10, batch_tile=None):
    w1_p, b1_p, w2_p, b2_p, w3_p, b3_p, w4_p, b4_p = prepared
    B, D_in = x.shape
    D_out_p = w4_p.shape[1]

    vmem_cap = _vmem_capacity_bytes()
    tb = _choose_batch_tile(B, batch_tile, vmem_cap)
    grid = (pl.cdiv(B, tb),)

    # (tb, 784): last dim equals the full array dim -> legal without padding to 128.
    x_spec = pl.BlockSpec((tb, D_in), lambda i: (i, 0))
    out_spec = pl.BlockSpec((tb, D_out_p), lambda i: (i, 0))

    def full_spec(arr):
        # Constant block index -> weights/biases stay resident in VMEM across steps.
        # (Default double-buffering kept: the full set is only ~1.3 MiB.)
        return pl.BlockSpec(arr.shape, lambda i: (0, 0))

    in_specs = [x_spec,
                full_spec(w1_p), full_spec(b1_p),
                full_spec(w2_p), full_spec(b2_p),
                full_spec(w3_p), full_spec(b3_p),
                full_spec(w4_p), full_spec(b4_p)]

    # Double-buffered footprint estimate against the UNPADDED 784-wide x tile.
    itemsize = 4
    w_bytes = sum(int(a.size) * itemsize for a in prepared)
    vmem_est = 2 * (tb * D_in * itemsize + tb * D_out_p * itemsize + w_bytes)
    compiler_kwargs = dict(dimension_semantics=("parallel",))
    if vmem_est > (12 << 20):
        # Bump the scoped VMEM limit, but never above physical VMEM capacity.
        compiler_kwargs["vmem_limit_bytes"] = min(vmem_est + (8 << 20),
                                                  vmem_cap - (4 << 20))

    out_p = pl.pallas_call(
        mlp_kernel,
        out_shape=jax.ShapeDtypeStruct((B, D_out_p), jnp.float32),
        grid_spec=pltpu.PrefetchScalarGridSpec(
            num_scalar_prefetch=0,
            grid=grid,
            in_specs=in_specs,
            out_specs=out_spec,
        ),
        compiler_params=pltpu.CompilerParams(**compiler_kwargs),
    )(x, w1_p, b1_p, w2_p, b2_p, w3_p, b3_p, w4_p, b4_p)

    # Lane-dense (B, 128) store in the kernel; the channel slice fuses under jit.
    return out_p[:, :out_features]


mlp_forward = jax.jit(_mlp_forward_impl, static_argnames=("out_features", "batch_tile"))


# ---------------------------------------------------------------------------
# Parameter init (PyTorch nn.Linear-style uniform +/- 1/sqrt(fan_in)),
# weights stored as (in_features, out_features).
# ---------------------------------------------------------------------------
def init_params(key):
    dims = [(784, 32), (32, 64), (64, 32), (32, 10)]
    names = ["layer1", "layer2", "layer3", "out_layer"]
    params = {}
    for name, (fan_in, fan_out) in zip(names, dims):
        key, kw, kb = jax.random.split(key, 3)
        bound = 1.0 / (fan_in ** 0.5)
        w = jax.random.uniform(kw, (fan_in, fan_out), jnp.float32, -bound, bound)
        b = jax.random.uniform(kb, (1, fan_out), jnp.float32, -bound, bound)
        params[name] = (w, b)
    return params


def mlp_reference(x, params):
    h = x
    for name in ["layer1", "layer2", "layer3"]:
        w, b = params[name]
        h = jnp.maximum(h @ w + b, 0.0)
    w, b = params["out_layer"]
    return h @ w + b


if __name__ == "__main__":
    key = jax.random.PRNGKey(0)
    kx, kp = jax.random.split(key)
    params = init_params(kp)
    prepared = prepare_params(params)   # one-time padding, reused across calls

    # Small, aligned batch.
    B = 8
    x = jax.random.normal(kx, (B, 784), dtype=jnp.float32)
    out = jax.block_until_ready(mlp_forward(x, prepared))
    ref = mlp_reference(x, params)
    assert out.shape == (B, 10)
    assert jnp.allclose(out, ref, atol=1e-4, rtol=1e-4), "mismatch vs reference (B=8)"

    # Ragged batch exercises the partial-last-block path (no padding anywhere).
    B2 = 13
    x2 = jax.random.normal(jax.random.PRNGKey(1), (B2, 784), dtype=jnp.float32)
    out2 = jax.block_until_ready(mlp_forward(x2, prepared))
    ref2 = mlp_reference(x2, params)
    assert out2.shape == (B2, 10)
    assert jnp.allclose(out2, ref2, atol=1e-4, rtol=1e-4), "mismatch vs reference (B=13)"

    print("KERNEL_OK")
</pallas_src>

<mosaic_0001>
module attributes {stable_mosaic.version = 11 : i64} {
  func.func @mlp_kernel(%arg0: i32, %arg1: memref<8x784xf32, #tpu.memory_space<vmem>>, %arg2: memref<784x128xf32, #tpu.memory_space<vmem>>, %arg3: memref<1x128xf32, #tpu.memory_space<vmem>>, %arg4: memref<128x128xf32, #tpu.memory_space<vmem>>, %arg5: memref<1x128xf32, #tpu.memory_space<vmem>>, %arg6: memref<128x128xf32, #tpu.memory_space<vmem>>, %arg7: memref<1x128xf32, #tpu.memory_space<vmem>>, %arg8: memref<128x128xf32, #tpu.memory_space<vmem>>, %arg9: memref<1x128xf32, #tpu.memory_space<vmem>>, %arg10: memref<8x128xf32, #tpu.memory_space<vmem>>) attributes {dimension_semantics = [#tpu.dimension_semantics<parallel>], iteration_bounds = array<i64: 1>, scalar_prefetch = 0 : i64, scratch_operands = 0 : i64, tpu.core_type = #tpu.core_type<tc>, window_params = [{transform_indices = @transform_0, window_bounds = array<i64: 8, 784>}, {pipeline_mode = #tpu.pipeline_mode<synchronous>, transform_indices = @transform_1, window_bounds = array<i64: 784, 128>}, {pipeline_mode = #tpu.pipeline_mode<synchronous>, transform_indices = @transform_2, window_bounds = array<i64: 1, 128>}, {pipeline_mode = #tpu.pipeline_mode<synchronous>, transform_indices = @transform_3, window_bounds = array<i64: 128, 128>}, {pipeline_mode = #tpu.pipeline_mode<synchronous>, transform_indices = @transform_4, window_bounds = array<i64: 1, 128>}, {pipeline_mode = #tpu.pipeline_mode<synchronous>, transform_indices = @transform_5, window_bounds = array<i64: 128, 128>}, {pipeline_mode = #tpu.pipeline_mode<synchronous>, transform_indices = @transform_6, window_bounds = array<i64: 1, 128>}, {pipeline_mode = #tpu.pipeline_mode<synchronous>, transform_indices = @transform_7, window_bounds = array<i64: 128, 128>}, {pipeline_mode = #tpu.pipeline_mode<synchronous>, transform_indices = @transform_8, window_bounds = array<i64: 1, 128>}, {transform_indices = @transform_9, window_bounds = array<i64: 8, 128>}]} {
    %c0 = arith.constant 0 : index
    %c0_0 = arith.constant 0 : index
    %0 = vector.load %arg1[%c0, %c0_0] : memref<8x784xf32, #tpu.memory_space<vmem>>, vector<8x784xf32>
    %c0_1 = arith.constant 0 : index
    %c0_2 = arith.constant 0 : index
    %1 = vector.load %arg2[%c0_1, %c0_2] : memref<784x128xf32, #tpu.memory_space<vmem>>, vector<784x128xf32>
    %cst = arith.constant dense<0.000000e+00> : vector<8x128xf32>
    %2 = tpu.matmul %0, %1, %cst {dimension_numbers = #tpu.dot_dimension_numbers<[1], [0], [0], [1], [0, 0, 1, 1], [], []>} : vector<8x784xf32>, vector<784x128xf32>, vector<8x128xf32> -> vector<8x128xf32>
    %c0_3 = arith.constant 0 : index
    %c0_4 = arith.constant 0 : index
    %3 = vector.load %arg3[%c0_3, %c0_4] : memref<1x128xf32, #tpu.memory_space<vmem>>, vector<1x128xf32>
    %4 = vector.broadcast %3 : vector<1x128xf32> to vector<8x128xf32>
    %5 = arith.addf %2, %4 : vector<8x128xf32>
    %cst_5 = arith.constant 0.000000e+00 : f32
    %6 = vector.broadcast %cst_5 : f32 to vector<8x128xf32>
    %7 = arith.maximumf %5, %6 : vector<8x128xf32>
    %c0_6 = arith.constant 0 : index
    %c0_7 = arith.constant 0 : index
    %8 = vector.load %arg4[%c0_6, %c0_7] : memref<128x128xf32, #tpu.memory_space<vmem>>, vector<128x128xf32>
    %cst_8 = arith.constant dense<0.000000e+00> : vector<8x128xf32>
    %9 = tpu.matmul %7, %8, %cst_8 {dimension_numbers = #tpu.dot_dimension_numbers<[1], [0], [0], [1], [0, 0, 1, 1], [], []>} : vector<8x128xf32>, vector<128x128xf32>, vector<8x128xf32> -> vector<8x128xf32>
    %c0_9 = arith.constant 0 : index
    %c0_10 = arith.constant 0 : index
    %10 = vector.load %arg5[%c0_9, %c0_10] : memref<1x128xf32, #tpu.memory_space<vmem>>, vector<1x128xf32>
    %11 = vector.broadcast %10 : vector<1x128xf32> to vector<8x128xf32>
    %12 = arith.addf %9, %11 : vector<8x128xf32>
    %cst_11 = arith.constant 0.000000e+00 : f32
    %13 = vector.broadcast %cst_11 : f32 to vector<8x128xf32>
    %14 = arith.maximumf %12, %13 : vector<8x128xf32>
    %c0_12 = arith.constant 0 : index
    %c0_13 = arith.constant 0 : index
    %15 = vector.load %arg6[%c0_12, %c0_13] : memref<128x128xf32, #tpu.memory_space<vmem>>, vector<128x128xf32>
    %cst_14 = arith.constant dense<0.000000e+00> : vector<8x128xf32>
    %16 = tpu.matmul %14, %15, %cst_14 {dimension_numbers = #tpu.dot_dimension_numbers<[1], [0], [0], [1], [0, 0, 1, 1], [], []>} : vector<8x128xf32>, vector<128x128xf32>, vector<8x128xf32> -> vector<8x128xf32>
    %c0_15 = arith.constant 0 : index
    %c0_16 = arith.constant 0 : index
    %17 = vector.load %arg7[%c0_15, %c0_16] : memref<1x128xf32, #tpu.memory_space<vmem>>, vector<1x128xf32>
    %18 = vector.broadcast %17 : vector<1x128xf32> to vector<8x128xf32>
    %19 = arith.addf %16, %18 : vector<8x128xf32>
    %cst_17 = arith.constant 0.000000e+00 : f32
    %20 = vector.broadcast %cst_17 : f32 to vector<8x128xf32>
    %21 = arith.maximumf %19, %20 : vector<8x128xf32>
    %c0_18 = arith.constant 0 : index
    %c0_19 = arith.constant 0 : index
    %22 = vector.load %arg8[%c0_18, %c0_19] : memref<128x128xf32, #tpu.memory_space<vmem>>, vector<128x128xf32>
    %cst_20 = arith.constant dense<0.000000e+00> : vector<8x128xf32>
    %23 = tpu.matmul %21, %22, %cst_20 {dimension_numbers = #tpu.dot_dimension_numbers<[1], [0], [0], [1], [0, 0, 1, 1], [], []>} : vector<8x128xf32>, vector<128x128xf32>, vector<8x128xf32> -> vector<8x128xf32>
    %c0_21 = arith.constant 0 : index
    %c0_22 = arith.constant 0 : index
    %24 = vector.load %arg9[%c0_21, %c0_22] : memref<1x128xf32, #tpu.memory_space<vmem>>, vector<1x128xf32>
    %25 = vector.broadcast %24 : vector<1x128xf32> to vector<8x128xf32>
    %26 = arith.addf %23, %25 : vector<8x128xf32>
    %c0_23 = arith.constant 0 : index
    %c0_24 = arith.constant 0 : index
    %27 = vector.load %arg10[%c0_23, %c0_24] : memref<8x128xf32, #tpu.memory_space<vmem>>, vector<8x128xf32>
    tpu.vector_store %arg10[%c0_23, %c0_24], %26 {strides = array<i32>} : memref<8x128xf32, #tpu.memory_space<vmem>>, vector<8x128xf32>,
    return
  }
  func.func @transform_0(%arg0: i32) -> (i32, i32) {
    %c0_i32 = arith.constant 0 : i32
    %c0_i32_0 = arith.constant 0 : i32
    return %arg0, %c0_i32 : i32, i32
  }
  func.func @transform_1(%arg0: i32) -> (i32, i32) {
    %c0_i32 = arith.constant 0 : i32
    %c0_i32_0 = arith.constant 0 : i32
    %c0_i32_1 = arith.constant 0 : i32
    return %c0_i32, %c0_i32_0 : i32, i32
  }
  func.func @transform_2(%arg0: i32) -> (i32, i32) {
    %c0_i32 = arith.constant 0 : i32
    %c0_i32_0 = arith.constant 0 : i32
    %c0_i32_1 = arith.constant 0 : i32
    return %c0_i32, %c0_i32_0 : i32, i32
  }
  func.func @transform_3(%arg0: i32) -> (i32, i32) {
    %c0_i32 = arith.constant 0 : i32
    %c0_i32_0 = arith.constant 0 : i32
    %c0_i32_1 = arith.constant 0 : i32
    return %c0_i32, %c0_i32_0 : i32, i32
  }
  func.func @transform_4(%arg0: i32) -> (i32, i32) {
    %c0_i32 = arith.constant 0 : i32
    %c0_i32_0 = arith.constant 0 : i32
    %c0_i32_1 = arith.constant 0 : i32
    return %c0_i32, %c0_i32_0 : i32, i32
  }
  func.func @transform_5(%arg0: i32) -> (i32, i32) {
    %c0_i32 = arith.constant 0 : i32
    %c0_i32_0 = arith.constant 0 : i32
    %c0_i32_1 = arith.constant 0 : i32
    return %c0_i32, %c0_i32_0 : i32, i32
  }
  func.func @transform_6(%arg0: i32) -> (i32, i32) {
    %c0_i32 = arith.constant 0 : i32
    %c0_i32_0 = arith.constant 0 : i32
    %c0_i32_1 = arith.constant 0 : i32
    return %c0_i32, %c0_i32_0 : i32, i32
  }
  func.func @transform_7(%arg0: i32) -> (i32, i32) {
    %c0_i32 = arith.constant 0 : i32
    %c0_i32_0 = arith.constant 0 : i32
    %c0_i32_1 = arith.constant 0 : i32
    return %c0_i32, %c0_i32_0 : i32, i32
  }
  func.func @transform_8(%arg0: i32) -> (i32, i32) {
    %c0_i32 = arith.constant 0 : i32
    %c0_i32_0 = arith.constant 0 : i32
    %c0_i32_1 = arith.constant 0 : i32
    return %c0_i32, %c0_i32_0 : i32, i32
  }
  func.func @transform_9(%arg0: i32) -> (i32, i32) {
    %c0_i32 = arith.constant 0 : i32
    %c0_i32_0 = arith.constant 0 : i32
    return %arg0, %c0_i32 : i32, i32
  }
}

</mosaic_0001>

<llo_original>
// kernel: _mlp_forward_impl.1
$region0: #{_mlp_forward_impl.1}
  #allocation0 [shape = 'u32[]', space=smem, size = 0x4, offset = 0x4, fixed_abs, tag = 'smem constant byte address 0x4 - core index']
  #allocation1 [shape = 'u32[144,128]{1,0:T(1,128)}', space=vmem, size = 0x12000, scoped, tag = 'internal scratch']
  %s0 = inlined_call_operand.hbm [shape: f32[8,784], index: 0, kind: input, shape index: {}]
  %s1 = inlined_call_operand.hbm [shape: f32[784,128], index: 1, kind: input, shape index: {}]
  %s2 = inlined_call_operand.vmem [shape: f32[1,128], index: 2, kind: input, shape index: {}]
  %s3 = inlined_call_operand.hbm [shape: f32[128,128], index: 3, kind: input, shape index: {}]
  %s4 = inlined_call_operand.vmem [shape: f32[1,128], index: 4, kind: input, shape index: {}]
  %s5 = inlined_call_operand.hbm [shape: f32[128,128], index: 5, kind: input, shape index: {}]
  %s6 = inlined_call_operand.vmem [shape: f32[1,128], index: 6, kind: input, shape index: {}]
  %s7 = inlined_call_operand.hbm [shape: f32[128,128], index: 7, kind: input, shape index: {}]
  %s8 = inlined_call_operand.vmem [shape: f32[1,128], index: 8, kind: input, shape index: {}]
  %s9 = inlined_call_operand.hbm [shape: f32[8,128], index: 9, kind: output, shape index: {}]
  %s10 = sld [smem:[#allocation0]]
  $region66: #{_mlp_forward_impl.1} parent=0
    _
  %s12 = ssub.s32 1, %s10
  %s13 = scalar_select 0, %s12, %s10
  $region1: #{_mlp_forward_impl.1} parent=0
    #allocation2 [shape = 'u8[28672]{0}', space=vmem, size = 0x7000, scoped, tag = 'input window, operand 0, single buffered']
    #allocation3 [shape = 's32[1]{0}', space=sflag, size = 0x4, scoped, tag = 'scoped memory for _mlp_forward_impl.1']
    #allocation4 [shape = 's32[1]{0}', space=sflag, size = 0x4, scoped, tag = 'scoped memory for _mlp_forward_impl.1']
    #allocation5 [shape = 'u8[401408]{0}', space=vmem, size = 0x62000, scoped, tag = 'input window, operand 1, single buffered']
    #allocation6 [shape = 's32[1]{0}', space=sflag, size = 0x4, scoped, tag = 'scoped memory for _mlp_forward_impl.1']
    #allocation7 [shape = 'u8[65536]{0}', space=vmem, size = 0x10000, scoped, tag = 'input window, operand 3, single buffered']
    #allocation8 [shape = 'u8[65536]{0}', space=vmem, size = 0x10000, scoped, tag = 'input window, operand 5, single buffered']
    #allocation9 [shape = 's32[1]{0}', space=sflag, size = 0x4, scoped, tag = 'scoped memory for _mlp_forward_impl.1']
    #allocation10 [shape = 'u8[65536]{0}', space=vmem, size = 0x10000, scoped, tag = 'input window, operand 7, single buffered']
    #allocation11 [shape = 'u8[4096]{0}', space=vmem, size = 0x1000, scoped, tag = 'output window, operand 0, single buffered']
    %14 = vsyncpa [#allocation3], 0
    %15 = vsyncpa [#allocation6], 0
    %16 = vsyncpa [#allocation9], 0
    %17 = vsyncpa [#allocation4], 0
    // Predicated region
    $region2: #{_mlp_forward_impl.1} parent=1 // pred_check
      _
    $region3: #{_mlp_forward_impl.1} parent=1 // pred_check_branch
      %19 = sbr.rel (0) target = $region5
    $region4: #{_mlp_forward_impl.1} parent=1 // pred_region
      %s21 = ssub.s32 896, 896
      %22 = vsyncadd [#allocation3], %s21
      %s24 = sshll.u32 [#allocation2], 4
      %s25 = int_to_ptr.vmem [resolvable:$true] %s24
      %27 = dma.hbm_to_vmem [thread:$0]  %s0, 896, %s25, [#allocation3]
    $region5: #{_mlp_forward_impl.1} parent=1 // pred_fallthru
      _
    // Predicated region
    $region6: #{_mlp_forward_impl.1} parent=1 // pred_check
      _
    $region7: #{_mlp_forward_impl.1} parent=1 // pred_check_branch
      %29 = sbr.rel (0) target = $region9
    $region8: #{_mlp_forward_impl.1} parent=1 // pred_region
      %s31 = ssub.s32 12544, 12544
      %32 = vsyncadd [#allocation6], %s31
      %s33 = sshll.u32 [#allocation5], 4
      %s34 = int_to_ptr.vmem [resolvable:$true] %s33
      %39 = dma.hbm_to_vmem [thread:$0]  %s1, 12544, %s34, [#allocation6], 128, 128, 8
    $region9: #{_mlp_forward_impl.1} parent=1 // pred_fallthru
      _
    // Predicated region
    $region10: #{_mlp_forward_impl.1} parent=1 // pred_check
      _
    $region11: #{_mlp_forward_impl.1} parent=1 // pred_check_branch
      %41 = sbr.rel (0) target = $region13
    $region12: #{_mlp_forward_impl.1} parent=1 // pred_region
      _
    $region13: #{_mlp_forward_impl.1} parent=1 // pred_fallthru
      _
    // Predicated region
    $region14: #{_mlp_forward_impl.1} parent=1 // pred_check
      _
    $region15: #{_mlp_forward_impl.1} parent=1 // pred_check_branch
      %43 = sbr.rel (0) target = $region17
    $region16: #{_mlp_forward_impl.1} parent=1 // pred_region
      %s45 = ssub.s32 2048, 2048
      %46 = vsyncadd [#allocation6], %s45
      %s47 = sshll.u32 [#allocation7], 4
      %s48 = int_to_ptr.vmem [resolvable:$true] %s47
      %53 = dma.hbm_to_vmem [thread:$0]  %s3, 2048, %s48, [#allocation6], 128, 128, 8
    $region17: #{_mlp_forward_impl.1} parent=1 // pred_fallthru
      _
    // Predicated region
    $region18: #{_mlp_forward_impl.1} parent=1 // pred_check
      _
    $region19: #{_mlp_forward_impl.1} parent=1 // pred_check_branch
      %55 = sbr.rel (0) target = $region21
    $region20: #{_mlp_forward_impl.1} parent=1 // pred_region
      _
    $region21: #{_mlp_forward_impl.1} parent=1 // pred_fallthru
      _
    // Predicated region
    $region22: #{_mlp_forward_impl.1} parent=1 // pred_check
      _
    $region23: #{_mlp_forward_impl.1} parent=1 // pred_check_branch
      %57 = sbr.rel (0) target = $region25
    $region24: #{_mlp_forward_impl.1} parent=1 // pred_region
      %s59 = ssub.s32 2048, 2048
      %60 = vsyncadd [#allocation9], %s59
      %s61 = sshll.u32 [#allocation8], 4
      %s62 = int_to_ptr.vmem [resolvable:$true] %s61
      %67 = dma.hbm_to_vmem [thread:$0]  %s5, 2048, %s62, [#allocation9], 128, 128, 8
    $region25: #{_mlp_forward_impl.1} parent=1 // pred_fallthru
      _
    // Predicated region
    $region26: #{_mlp_forward_impl.1} parent=1 // pred_check
      _
    $region27: #{_mlp_forward_impl.1} parent=1 // pred_check_branch
      %69 = sbr.rel (0) target = $region29
    $region28: #{_mlp_forward_impl.1} parent=1 // pred_region
      _
    $region29: #{_mlp_forward_impl.1} parent=1 // pred_fallthru
      _
    // Predicated region
    $region30: #{_mlp_forward_impl.1} parent=1 // pred_check
      _
    $region31: #{_mlp_forward_impl.1} parent=1 // pred_check_branch
      %71 = sbr.rel (0) target = $region33
    $region32: #{_mlp_forward_impl.1} parent=1 // pred_region
      %s73 = ssub.s32 2048, 2048
      %74 = vsyncadd [#allocation9], %s73
      %s75 = sshll.u32 [#allocation10], 4
      %s76 = int_to_ptr.vmem [resolvable:$true] %s75
      %81 = dma.hbm_to_vmem [thread:$0]  %s7, 2048, %s76, [#allocation9], 128, 128, 8
    $region33: #{_mlp_forward_impl.1} parent=1 // pred_fallthru
      _
    // Predicated region
    $region34: #{_mlp_forward_impl.1} parent=1 // pred_check
      _
    $region35: #{_mlp_forward_impl.1} parent=1 // pred_check_branch
      %83 = sbr.rel (0) target = $region37
    $region36: #{_mlp_forward_impl.1} parent=1 // pred_region
      _
    $region37: #{_mlp_forward_impl.1} parent=1 // pred_fallthru
      _
    // Predicated region
    $region38: #{_mlp_forward_impl.1} parent=1 // pred_check
      _
    $region39: #{_mlp_forward_impl.1} parent=1 // pred_check_branch
      %85 = sbr.rel (0) target = $region41
    $region40: #{_mlp_forward_impl.1} parent=1 // pred_region
      %86 = dma.done [#allocation3], 896
    $region41: #{_mlp_forward_impl.1} parent=1 // pred_fallthru
      _
    // Predicated region
    $region42: #{_mlp_forward_impl.1} parent=1 // pred_check
      _
    $region43: #{_mlp_forward_impl.1} parent=1 // pred_check_branch
      %88 = sbr.rel (0) target = $region45
    $region44: #{_mlp_forward_impl.1} parent=1 // pred_region
      %89 = dma.done [#allocation6], 12544
    $region45: #{_mlp_forward_impl.1} parent=1 // pred_fallthru
      _
    // Predicated region
    $region46: #{_mlp_forward_impl.1} parent=1 // pred_check
      _
    $region47: #{_mlp_forward_impl.1} parent=1 // pred_check_branch
      %91 = sbr.rel (0) target = $region49
    $region48: #{_mlp_forward_impl.1} parent=1 // pred_region
      %92 = dma.done [#allocation6], 2048
    $region49: #{_mlp_forward_impl.1} parent=1 // pred_fallthru
      _
    // Predicated region
    $region50: #{_mlp_forward_impl.1} parent=1 // pred_check
      _
    $region51: #{_mlp_forward_impl.1} parent=1 // pred_check_branch
      %94 = sbr.rel (0) target = $region53
    $region52: #{_mlp_forward_impl.1} parent=1 // pred_region
      %95 = dma.done [#allocation9], 2048
    $region53: #{_mlp_forward_impl.1} parent=1 // pred_fallthru
      _
    // Predicated region
    $region54: #{_mlp_forward_impl.1} parent=1 // pred_check
      _
    $region55: #{_mlp_forward_impl.1} parent=1 // pred_check_branch
      %97 = sbr.rel (0) target = $region57
    $region56: #{_mlp_forward_impl.1} parent=1 // pred_region
      %98 = dma.done [#allocation9], 2048
    $region57: #{_mlp_forward_impl.1} parent=1 // pred_fallthru
      _
    %v99 = vld [vmem:[#allocation2] sm:$0xff]
    %v100 = vld [vmem:[#allocation2 + $0x8] sm:$0xff]
    %v101 = vld [vmem:[#allocation2 + $0x10] sm:$0xff]
    %v102 = vld [vmem:[#allocation2 + $0x18] sm:$0xff]
    %v103 = vld [vmem:[#allocation2 + $0x20] sm:$0xff]
    %v104 = vld [vmem:[#allocation2 + $0x28] sm:$0xff]
    %v105 = vld [vmem:[#allocation2 + $0x30] sm:$0xff]
    %v106 = vld [vmem:[#allocation5] sm:$0xff]
    %v107 = vld [vmem:[#allocation5 + $0x8] sm:$0xff]
    %v108 = vld [vmem:[#allocation5 + $0x10] sm:$0xff]
    %v109 = vld [vmem:[#allocation5 + $0x18] sm:$0xff]
    %v110 = vld [vmem:[#allocation5 + $0x20] sm:$0xff]
    %v111 = vld [vmem:[#allocation5 + $0x28] sm:$0xff]
    %v112 = vld [vmem:[#allocation5 + $0x30] sm:$0xff]
    %v113 = vld [vmem:[#allocation5 + $0x38] sm:$0xff]
    %v114 = vld [vmem:[#allocation5 + $0x40] sm:$0xff]
    %v115 = vld [vmem:[#allocation5 + $0x48] sm:$0xff]
    %v116 = vld [vmem:[#allocation5 + $0x50] sm:$0xff]
    %v117 = vld [vmem:[#allocation5 + $0x58] sm:$0xff]
    %v118 = vld [vmem:[#allocation5 + $0x60] sm:$0xff]
    %v119 = vld [vmem:[#allocation5 + $0x68] sm:$0xff]
    %v120 = vld [vmem:[#allocation5 + $0x70] sm:$0xff]
    %v121 = vld [vmem:[#allocation5 + $0x78] sm:$0xff]
    %v122 = vld [vmem:[#allocation5 + $0x80] sm:$0xff]
    %v123 = vld [vmem:[#allocation5 + $0x88] sm:$0xff]
    %v124 = vld [vmem:[#allocation5 + $0x90] sm:$0xff]
    %v125 = vld [vmem:[#allocation5 + $0x98] sm:$0xff]
    %v126 = vld [vmem:[#allocation5 + $0xa0] sm:$0xff]
    %v127 = vld [vmem:[#allocation5 + $0xa8] sm:$0xff]
    %v128 = vld [vmem:[#allocation5 + $0xb0] sm:$0xff]
    %v129 = vld [vmem:[#allocation5 + $0xb8] sm:$0xff]
    %v130 = vld [vmem:[#allocation5 + $0xc0] sm:$0xff]
    %v131 = vld [vmem:[#allocation5 + $0xc8] sm:$0xff]
    %v132 = vld [vmem:[#allocation5 + $0xd0] sm:$0xff]
    %v133 = vld [vmem:[#allocation5 + $0xd8] sm:$0xff]
    %v134 = vld [vmem:[#allocation5 + $0xe0] sm:$0xff]
    %v135 = vld [vmem:[#allocation5 + $0xe8] sm:$0xff]
    %v136 = vld [vmem:[#allocation5 + $0xf0] sm:$0xff]
    %v137 = vld [vmem:[#allocation5 + $0xf8] sm:$0xff]
    %v138 = vld [vmem:[#allocation5 + $0x100] sm:$0xff]
    %v139 = vld [vmem:[#allocation5 + $0x108] sm:$0xff]
    %v140 = vld [vmem:[#allocation5 + $0x110] sm:$0xff]
    %v141 = vld [vmem:[#allocation5 + $0x118] sm:$0xff]
    %v142 = vld [vmem:[#allocation5 + $0x120] sm:$0xff]
    %v143 = vld [vmem:[#allocation5 + $0x128] sm:$0xff]
    %v144 = vld [vmem:[#allocation5 + $0x130] sm:$0xff]
    %v145 = vld [vmem:[#allocation5 + $0x138] sm:$0xff]
    %v146 = vld [vmem:[#allocation5 + $0x140] sm:$0xff]
    %v147 = vld [vmem:[#allocation5 + $0x148] sm:$0xff]
    %v148 = vld [vmem:[#allocation5 + $0x150] sm:$0xff]
    %v149 = vld [vmem:[#allocation5 + $0x158] sm:$0xff]
    %v150 = vld [vmem:[#allocation5 + $0x160] sm:$0xff]
    %v151 = vld [vmem:[#allocation5 + $0x168] sm:$0xff]
    %v152 = vld [vmem:[#allocation5 + $0x170] sm:$0xff]
    %v153 = vld [vmem:[#allocation5 + $0x178] sm:$0xff]
    %v154 = vld [vmem:[#allocation5 + $0x180] sm:$0xff]
    %v155 = vld [vmem:[#allocation5 + $0x188] sm:$0xff]
    %v156 = vld [vmem:[#allocation5 + $0x190] sm:$0xff]
    %v157 = vld [vmem:[#allocation5 + $0x198] sm:$0xff]
    %v158 = vld [vmem:[#allocation5 + $0x1a0] sm:$0xff]
    %v159 = vld [vmem:[#allocation5 + $0x1a8] sm:$0xff]
    %v160 = vld [vmem:[#allocation5 + $0x1b0] sm:$0xff]
    %v161 = vld [vmem:[#allocation5 + $0x1b8] sm:$0xff]
    %v162 = vld [vmem:[#allocation5 + $0x1c0] sm:$0xff]
    %v163 = vld [vmem:[#allocation5 + $0x1c8] sm:$0xff]
    %v164 = vld [vmem:[#allocation5 + $0x1d0] sm:$0xff]
    %v165 = vld [vmem:[#allocation5 + $0x1d8] sm:$0xff]
    %v166 = vld [vmem:[#allocation5 + $0x1e0] sm:$0xff]
    %v167 = vld [vmem:[#allocation5 + $0x1e8] sm:$0xff]
    %v168 = vld [vmem:[#allocation5 + $0x1f0] sm:$0xff]
    %v169 = vld [vmem:[#allocation5 + $0x1f8] sm:$0xff]
    %v170 = vld [vmem:[#allocation5 + $0x200] sm:$0xff]
    %v171 = vld [vmem:[#allocation5 + $0x208] sm:$0xff]
    %v172 = vld [vmem:[#allocation5 + $0x210] sm:$0xff]
    %v173 = vld [vmem:[#allocation5 + $0x218] sm:$0xff]
    %v174 = vld [vmem:[#allocation5 + $0x220] sm:$0xff]
    %v175 = vld [vmem:[#allocation5 + $0x228] sm:$0xff]
    %v176 = vld [vmem:[#allocation5 + $0x230] sm:$0xff]
    %v177 = vld [vmem:[#allocation5 + $0x238] sm:$0xff]
    %v178 = vld [vmem:[#allocation5 + $0x240] sm:$0xff]
    %v179 = vld [vmem:[#allocation5 + $0x248] sm:$0xff]
    %v180 = vld [vmem:[#allocation5 + $0x250] sm:$0xff]
    %v181 = vld [vmem:[#allocation5 + $0x258] sm:$0xff]
    %v182 = vld [vmem:[#allocation5 + $0x260] sm:$0xff]
    %v183 = vld [vmem:[#allocation5 + $0x268] sm:$0xff]
    %v184 = vld [vmem:[#allocation5 + $0x270] sm:$0xff]
    %v185 = vld [vmem:[#allocation5 + $0x278] sm:$0xff]
    %v186 = vld [vmem:[#allocation5 + $0x280] sm:$0xff]
    %v187 = vld [vmem:[#allocation5 + $0x288] sm:$0xff]
    %v188 = vld [vmem:[#allocation5 + $0x290] sm:$0xff]
    %v189 = vld [vmem:[#allocation5 + $0x298] sm:$0xff]
    %v190 = vld [vmem:[#allocation5 + $0x2a0] sm:$0xff]
    %v191 = vld [vmem:[#allocation5 + $0x2a8] sm:$0xff]
    %v192 = vld [vmem:[#allocation5 + $0x2b0] sm:$0xff]
    %v193 = vld [vmem:[#allocation5 + $0x2b8] sm:$0xff]
    %v194 = vld [vmem:[#allocation5 + $0x2c0] sm:$0xff]
    %v195 = vld [vmem:[#allocation5 + $0x2c8] sm:$0xff]
    %v196 = vld [vmem:[#allocation5 + $0x2d0] sm:$0xff]
    %v197 = vld [vmem:[#allocation5 + $0x2d8] sm:$0xff]
    %v198 = vld [vmem:[#allocation5 + $0x2e0] sm:$0xff]
    %v199 = vld [vmem:[#allocation5 + $0x2e8] sm:$0xff]
    %v200 = vld [vmem:[#allocation5 + $0x2f0] sm:$0xff]
    %v201 = vld [vmem:[#allocation5 + $0x2f8] sm:$0xff]
    %v202 = vld [vmem:[#allocation5 + $0x300] sm:$0xff]
    %v203 = vld [vmem:[#allocation5 + $0x308] sm:$0xff]
    %v204 = vld [vmem:[%s2] sm:$0x1]
    %v206 = vlaneseq
    %v207 = vshrl.u32 %v206, 7
    %v208 = vsub.s32 0, %v207
    %v209 = vrot.slane %v204, %v208
    %vm211 = vcmask 130048
    %v213 = vsel %vm211, %v105, 0
    %215 = vmatprep.subr.mxu0 0.0
    %216 = vmatpush1.msra.mxu0 %v121
    %217 = vmatprep.subr.mxu0 0.0
    %218 = vmatpush1.msra.mxu0 %v120
    %219 = vmatprep.subr.mxu0 0.0
    %220 = vmatpush1.msra.mxu0 %v119
    %221 = vmatprep.subr.mxu0 0.0
    %222 = vmatpush1.msra.mxu0 %v118
    %223 = vmatprep.subr.mxu0 0.0
    %224 = vmatpush1.msra.mxu0 %v117
    %225 = vmatprep.subr.mxu0 0.0
    %226 = vmatpush1.msra.mxu0 %v116
    %227 = vmatprep.subr.mxu0 0.0
    %228 = vmatpush1.msra.mxu0 %v115
    %229 = vmatprep.subr.mxu0 0.0
    %230 = vmatpush1.msra.mxu0 %v114
    %231 = vmatprep.subr.mxu0 0.0
    %232 = vmatpush1.msra.mxu0 %v113
    %233 = vmatprep.subr.mxu0 0.0
    %234 = vmatpush1.msra.mxu0 %v112
    %235 = vmatprep.subr.mxu0 0.0
    %236 = vmatpush1.msra.mxu0 %v111
    %237 = vmatprep.subr.mxu0 0.0
    %238 = vmatpush1.msra.mxu0 %v110
    %239 = vmatprep.subr.mxu0 0.0
    %240 = vmatpush1.msra.mxu0 %v109
    %241 = vmatprep.subr.mxu0 0.0
    %242 = vmatpush1.msra.mxu0 %v108
    %243 = vmatprep.subr.mxu0 0.0
    %244 = vmatpush1.msra.mxu0 %v107
    %245 = vmatprep.subr.mxu0 0.0
    %246 = vmatpush1.msra.mxu0 %v106
    %247 = vmatprep.subr.mxu0 0.0
    %248 = vmatpush2.msra.mxu0 %v137
    %249 = vmatprep.subr.mxu0 0.0
    %250 = vmatpush2.msra.mxu0 %v136
    %251 = vmatprep.subr.mxu0 0.0
    %252 = vmatpush2.msra.mxu0 %v135
    %253 = vmatprep.subr.mxu0 0.0
    %254 = vmatpush2.msra.mxu0 %v134
    %255 = vmatprep.subr.mxu0 0.0
    %256 = vmatpush2.msra.mxu0 %v133
    %257 = vmatprep.subr.mxu0 0.0
    %258 = vmatpush2.msra.mxu0 %v132
    %259 = vmatprep.subr.mxu0 0.0
    %260 = vmatpush2.msra.mxu0 %v131
    %261 = vmatprep.subr.mxu0 0.0
    %262 = vmatpush2.msra.mxu0 %v130
    %263 = vmatprep.subr.mxu0 0.0
    %264 = vmatpush2.msra.mxu0 %v129
    %265 = vmatprep.subr.mxu0 0.0
    %266 = vmatpush2.msra.mxu0 %v128
    %267 = vmatprep.subr.mxu0 0.0
    %268 = vmatpush2.msra.mxu0 %v127
    %269 = vmatprep.subr.mxu0 0.0
    %270 = vmatpush2.msra.mxu0 %v126
    %271 = vmatprep.subr.mxu0 0.0
    %272 = vmatpush2.msra.mxu0 %v125
    %273 = vmatprep.subr.mxu0 0.0
    %274 = vmatpush2.msra.mxu0 %v124
    %275 = vmatprep.subr.mxu0 0.0
    %276 = vmatpush2.msra.mxu0 %v123
    %277 = vmatprep.subr.mxu0 0.0
    %278 = vmatpush2.msra.mxu0 %v122
    %279 = vmatprep.mubr.f32.mxu0 %v100
    %280 = vmatmul.mubr.f32.gmra.mxu0 %v99
    %v281 = vpop.f32.mrf.mxu0
    %v282 = vadd.f32 %v209, %v281
    %v283 = vpop.f32.mrf.mxu0
    %284 = vdwg.mxu0
    %285 = vmatprep.subr.mxu0 0.0
    %286 = vmatpush1.msra.mxu0 %v153
    %287 = vmatprep.subr.mxu0 0.0
    %288 = vmatpush1.msra.mxu0 %v152
    %289 = vmatprep.subr.mxu0 0.0
    %290 = vmatpush1.msra.mxu0 %v151
    %291 = vmatprep.subr.mxu0 0.0
    %292 = vmatpush1.msra.mxu0 %v150
    %293 = vmatprep.subr.mxu0 0.0
    %294 = vmatpush1.msra.mxu0 %v149
    %295 = vmatprep.subr.mxu0 0.0
    %296 = vmatpush1.msra.mxu0 %v148
    %297 = vmatprep.subr.mxu0 0.0
    %298 = vmatpush1.msra.mxu0 %v147
    %299 = vmatprep.subr.mxu0 0.0
    %300 = vmatpush1.msra.mxu0 %v146
    %301 = vmatprep.subr.mxu0 0.0
    %302 = vmatpush1.msra.mxu0 %v145
    %303 = vmatprep.subr.mxu0 0.0
    %304 = vmatpush1.msra.mxu0 %v144
    %305 = vmatprep.subr.mxu0 0.0
    %306 = vmatpush1.msra.mxu0 %v143
    %307 = vmatprep.subr.mxu0 0.0
    %308 = vmatpush1.msra.mxu0 %v142
    %309 = vmatprep.subr.mxu0 0.0
    %310 = vmatpush1.msra.mxu0 %v141
    %311 = vmatprep.subr.mxu0 0.0
    %312 = vmatpush1.msra.mxu0 %v140
    %313 = vmatprep.subr.mxu0 0.0
    %314 = vmatpush1.msra.mxu0 %v139
    %315 = vmatprep.subr.mxu0 0.0
    %316 = vmatpush1.msra.mxu0 %v138
    %317 = vmatprep.subr.mxu0 0.0
    %318 = vmatpush2.msra.mxu0 %v169
    %319 = vmatprep.subr.mxu0 0.0
    %320 = vmatpush2.msra.mxu0 %v168
    %321 = vmatprep.subr.mxu0 0.0
    %322 = vmatpush2.msra.mxu0 %v167
    %323 = vmatprep.subr.mxu0 0.0
    %324 = vmatpush2.msra.mxu0 %v166
    %325 = vmatprep.subr.mxu0 0.0
    %326 = vmatpush2.msra.mxu0 %v165
    %327 = vmatprep.subr.mxu0 0.0
    %328 = vmatpush2.msra.mxu0 %v164
    %329 = vmatprep.subr.mxu0 0.0
    %330 = vmatpush2.msra.mxu0 %v163
    %331 = vmatprep.subr.mxu0 0.0
    %332 = vmatpush2.msra.mxu0 %v162
    %333 = vmatprep.subr.mxu0 0.0
    %334 = vmatpush2.msra.mxu0 %v161
    %335 = vmatprep.subr.mxu0 0.0
    %336 = vmatpush2.msra.mxu0 %v160
    %337 = vmatprep.subr.mxu0 0.0
    %338 = vmatpush2.msra.mxu0 %v159
    %339 = vmatprep.subr.mxu0 0.0
    %340 = vmatpush2.msra.mxu0 %v158
    %341 = vmatprep.subr.mxu0 0.0
    %342 = vmatpush2.msra.mxu0 %v157
    %343 = vmatprep.subr.mxu0 0.0
    %344 = vmatpush2.msra.mxu0 %v156
    %345 = vmatprep.subr.mxu0 0.0
    %346 = vmatpush2.msra.mxu0 %v155
    %347 = vmatprep.subr.mxu0 0.0
    %348 = vmatpush2.msra.mxu0 %v154
    %349 = vmatprep.mubr.f32.mxu0 %v102
    %350 = vmatmul.mubr.f32.gmra.mxu0 %v101
    %v351 = vpop.f32.mrf.mxu0
    %v352 = vadd.f32 %v282, %v351
    %v353 = vpop.f32.mrf.mxu0
    %354 = vdwg.mxu0
    %355 = vmatprep.subr.mxu0 0.0
    %356 = vmatpush1.msra.mxu0 %v185
    %357 = vmatprep.subr.mxu0 0.0
    %358 = vmatpush1.msra.mxu0 %v184
    %359 = vmatprep.subr.mxu0 0.0
    %360 = vmatpush1.msra.mxu0 %v183
    %361 = vmatprep.subr.mxu0 0.0
    %362 = vmatpush1.msra.mxu0 %v182
    %363 = vmatprep.subr.mxu0 0.0
    %364 = vmatpush1.msra.mxu0 %v181
    %365 = vmatprep.subr.mxu0 0.0
    %366 = vmatpush1.msra.mxu0 %v180
    %367 = vmatprep.subr.mxu0 0.0
    %368 = vmatpush1.msra.mxu0 %v179
    %369 = vmatprep.subr.mxu0 0.0
    %370 = vmatpush1.msra.mxu0 %v178
    %371 = vmatprep.subr.mxu0 0.0
    %372 = vmatpush1.msra.mxu0 %v177
    %373 = vmatprep.subr.mxu0 0.0
    %374 = vmatpush1.msra.mxu0 %v176
    %375 = vmatprep.subr.mxu0 0.0
    %376 = vmatpush1.msra.mxu0 %v175
    %377 = vmatprep.subr.mxu0 0.0
    %378 = vmatpush1.msra.mxu0 %v174
    %379 = vmatprep.subr.mxu0 0.0
    %380 = vmatpush1.msra.mxu0 %v173
    %381 = vmatprep.subr.mxu0 0.0
    %382 = vmatpush1.msra.mxu0 %v172
    %383 = vmatprep.subr.mxu0 0.0
    %384 = vmatpush1.msra.mxu0 %v171
    %385 = vmatprep.subr.mxu0 0.0
    %386 = vmatpush1.msra.mxu0 %v170
    %387 = vmatprep.subr.mxu0 0.0
    %388 = vmatpush2.msra.mxu0 %v201
    %389 = vmatprep.subr.mxu0 0.0
    %390 = vmatpush2.msra.mxu0 %v200
    %391 = vmatprep.subr.mxu0 0.0
    %392 = vmatpush2.msra.mxu0 %v199
    %393 = vmatprep.subr.mxu0 0.0
    %394 = vmatpush2.msra.mxu0 %v198
    %395 = vmatprep.subr.mxu0 0.0
    %396 = vmatpush2.msra.mxu0 %v197
    %397 = vmatprep.subr.mxu0 0.0
    %398 = vmatpush2.msra.mxu0 %v196
    %399 = vmatprep.subr.mxu0 0.0
    %400 = vmatpush2.msra.mxu0 %v195
    %401 = vmatprep.subr.mxu0 0.0
    %402 = vmatpush2.msra.mxu0 %v194
    %403 = vmatprep.subr.mxu0 0.0
    %404 = vmatpush2.msra.mxu0 %v193
    %405 = vmatprep.subr.mxu0 0.0
    %406 = vmatpush2.msra.mxu0 %v192
    %407 = vmatprep.subr.mxu0 0.0
    %408 = vmatpush2.msra.mxu0 %v191
    %409 = vmatprep.subr.mxu0 0.0
    %410 = vmatpush2.msra.mxu0 %v190
    %411 = vmatprep.subr.mxu0 0.0
    %412 = vmatpush2.msra.mxu0 %v189
    %413 = vmatprep.subr.mxu0 0.0
    %414 = vmatpush2.msra.mxu0 %v188
    %415 = vmatprep.subr.mxu0 0.0
    %416 = vmatpush2.msra.mxu0 %v187
    %417 = vmatprep.subr.mxu0 0.0
    %418 = vmatpush2.msra.mxu0 %v186
    %419 = vmatprep.mubr.f32.mxu0 %v104
    %420 = vmatmul.mubr.f32.gmra.mxu0 %v103
    %v421 = vpop.f32.mrf.mxu0
    %v422 = vadd.f32 %v352, %v421
    %v423 = vpop.f32.mrf.mxu0
    %424 = vdwg.mxu0
    %425 = vmatprep.subr.mxu0 0.0
    %426 = vmatpush1.msra.mxu0 0.0
    %427 = vmatprep.subr.mxu0 0.0
    %428 = vmatpush1.msra.mxu0 0.0
    %429 = vmatprep.subr.mxu0 0.0
    %430 = vmatpush1.msra.mxu0 0.0
    %431 = vmatprep.subr.mxu0 0.0
    %432 = vmatpush1.msra.mxu0 0.0
    %433 = vmatprep.subr.mxu0 0.0
    %434 = vmatpush1.msra.mxu0 0.0
    %435 = vmatprep.subr.mxu0 0.0
    %436 = vmatpush1.msra.mxu0 0.0
    %437 = vmatprep.subr.mxu0 0.0
    %438 = vmatpush1.msra.mxu0 0.0
    %439 = vmatprep.subr.mxu0 0.0
    %440 = vmatpush1.msra.mxu0 0.0
    %441 = vmatprep.subr.mxu0 0.0
    %442 = vmatpush1.msra.mxu0 0.0
    %443 = vmatprep.subr.mxu0 0.0
    %444 = vmatpush1.msra.mxu0 0.0
    %445 = vmatprep.subr.mxu0 0.0
    %446 = vmatpush1.msra.mxu0 0.0
    %447 = vmatprep.subr.mxu0 0.0
    %448 = vmatpush1.msra.mxu0 0.0
    %449 = vmatprep.subr.mxu0 0.0
    %450 = vmatpush1.msra.mxu0 0.0
    %451 = vmatprep.subr.mxu0 0.0
    %452 = vmatpush1.msra.mxu0 0.0
    %453 = vmatprep.subr.mxu0 0.0
    %454 = vmatpush1.msra.mxu0 %v203
    %455 = vmatprep.subr.mxu0 0.0
    %456 = vmatpush1.msra.mxu0 %v202
    %457 = vmatprep.subr.mxu0 0.0
    %458 = vmatpush2.msra.mxu0 0.0
    %459 = vmatprep.subr.mxu0 0.0
    %460 = vmatpush2.msra.mxu0 0.0
    %461 = vmatprep.subr.mxu0 0.0
    %462 = vmatpush2.msra.mxu0 0.0
    %463 = vmatprep.subr.mxu0 0.0
    %464 = vmatpush2.msra.mxu0 0.0
    %465 = vmatprep.subr.mxu0 0.0
    %466 = vmatpush2.msra.mxu0 0.0
    %467 = vmatprep.subr.mxu0 0.0
    %468 = vmatpush2.msra.mxu0 0.0
    %469 = vmatprep.subr.mxu0 0.0
    %470 = vmatpush2.msra.mxu0 0.0
    %471 = vmatprep.subr.mxu0 0.0
    %472 = vmatpush2.msra.mxu0 0.0
    %473 = vmatprep.subr.mxu0 0.0
    %474 = vmatpush2.msra.mxu0 0.0
    %475 = vmatprep.subr.mxu0 0.0
    %476 = vmatpush2.msra.mxu0 0.0
    %477 = vmatprep.subr.mxu0 0.0
    %478 = vmatpush2.msra.mxu0 0.0
    %479 = vmatprep.subr.mxu0 0.0
    %480 = vmatpush2.msra.mxu0 0.0
    %481 = vmatprep.subr.mxu0 0.0
    %482 = vmatpush2.msra.mxu0 0.0
    %483 = vmatprep.subr.mxu0 0.0
    %484 = vmatpush2.msra.mxu0 0.0
    %485 = vmatprep.subr.mxu0 0.0
    %486 = vmatpush2.msra.mxu0 0.0
    %487 = vmatprep.subr.mxu0 0.0
    %488 = vmatpush2.msra.mxu0 0.0
    %489 = vmatprep.mubr.f32.mxu0 0.0
    %490 = vmatmul.mubr.f32.gmra.mxu0 %v213
    %v491 = vpop.f32.mrf.mxu0
    %v492 = vadd.f32 %v422, %v491
    %v493 = vpop.f32.mrf.mxu0
    %494 = vdwg.mxu0
    %v495 = vmax.f32 %v492, 0.0
    %v496 = vld [vmem:[#allocation7] sm:$0xff]
    %v497 = vld [vmem:[#allocation7 + $0x8] sm:$0xff]
    %v498 = vld [vmem:[#allocation7 + $0x10] sm:$0xff]
    %v499 = vld [vmem:[#allocation7 + $0x18] sm:$0xff]
    %v500 = vld [vmem:[#allocation7 + $0x20] sm:$0xff]
    %v501 = vld [vmem:[#allocation7 + $0x28] sm:$0xff]
    %v502 = vld [vmem:[#allocation7 + $0x30] sm:$0xff]
    %v503 = vld [vmem:[#allocation7 + $0x38] sm:$0xff]
    %v504 = vld [vmem:[#allocation7 + $0x40] sm:$0xff]
    %v505 = vld [vmem:[#allocation7 + $0x48] sm:$0xff]
    %v506 = vld [vmem:[#allocation7 + $0x50] sm:$0xff]
    %v507 = vld [vmem:[#allocation7 + $0x58] sm:$0xff]
    %v508 = vld [vmem:[#allocation7 + $0x60] sm:$0xff]
    %v509 = vld [vmem:[#allocation7 + $0x68] sm:$0xff]
    %v510 = vld [vmem:[#allocation7 + $0x70] sm:$0xff]
    %v511 = vld [vmem:[#allocation7 + $0x78] sm:$0xff]
    %v512 = vld [vmem:[%s4] sm:$0x1]
    %v514 = vlaneseq
    %v515 = vshrl.u32 %v514, 7
    %v516 = vsub.s32 0, %v515
    %v517 = vrot.slane %v512, %v516
    %519 = vmatprep.subr.mxu0 0.0
    %520 = vmatpush1.msra.mxu0 %v511
    %521 = vmatprep.subr.mxu0 0.0
    %522 = vmatpush1.msra.mxu0 %v510
    %523 = vmatprep.subr.mxu0 0.0
    %524 = vmatpush1.msra.mxu0 %v509
    %525 = vmatprep.subr.mxu0 0.0
    %526 = vmatpush1.msra.mxu0 %v508
    %527 = vmatprep.subr.mxu0 0.0
    %528 = vmatpush1.msra.mxu0 %v507
    %529 = vmatprep.subr.mxu0 0.0
    %530 = vmatpush1.msra.mxu0 %v506
    %531 = vmatprep.subr.mxu0 0.0
    %532 = vmatpush1.msra.mxu0 %v505
    %533 = vmatprep.subr.mxu0 0.0
    %534 = vmatpush1.msra.mxu0 %v504
    %535 = vmatprep.subr.mxu0 0.0
    %536 = vmatpush1.msra.mxu0 %v503
    %537 = vmatprep.subr.mxu0 0.0
    %538 = vmatpush1.msra.mxu0 %v502
    %539 = vmatprep.subr.mxu0 0.0
    %540 = vmatpush1.msra.mxu0 %v501
    %541 = vmatprep.subr.mxu0 0.0
    %542 = vmatpush1.msra.mxu0 %v500
    %543 = vmatprep.subr.mxu0 0.0
    %544 = vmatpush1.msra.mxu0 %v499
    %545 = vmatprep.subr.mxu0 0.0
    %546 = vmatpush1.msra.mxu0 %v498
    %547 = vmatprep.subr.mxu0 0.0
    %548 = vmatpush1.msra.mxu0 %v497
    %549 = vmatprep.subr.mxu0 0.0
    %550 = vmatpush1.msra.mxu0 %v496
    %551 = vmatprep.subr.mxu0 0.0
    %552 = vmatpush2.msra.mxu0 0.0
    %553 = vmatprep.subr.mxu0 0.0
    %554 = vmatpush2.msra.mxu0 0.0
    %555 = vmatprep.subr.mxu0 0.0
    %556 = vmatpush2.msra.mxu0 0.0
    %557 = vmatprep.subr.mxu0 0.0
    %558 = vmatpush2.msra.mxu0 0.0
    %559 = vmatprep.subr.mxu0 0.0
    %560 = vmatpush2.msra.mxu0 0.0
    %561 = vmatprep.subr.mxu0 0.0
    %562 = vmatpush2.msra.mxu0 0.0
    %563 = vmatprep.subr.mxu0 0.0
    %564 = vmatpush2.msra.mxu0 0.0
    %565 = vmatprep.subr.mxu0 0.0
    %566 = vmatpush2.msra.mxu0 0.0
    %567 = vmatprep.subr.mxu0 0.0
    %568 = vmatpush2.msra.mxu0 0.0
    %569 = vmatprep.subr.mxu0 0.0
    %570 = vmatpush2.msra.mxu0 0.0
    %571 = vmatprep.subr.mxu0 0.0
    %572 = vmatpush2.msra.mxu0 0.0
    %573 = vmatprep.subr.mxu0 0.0
    %574 = vmatpush2.msra.mxu0 0.0
    %575 = vmatprep.subr.mxu0 0.0
    %576 = vmatpush2.msra.mxu0 0.0
    %577 = vmatprep.subr.mxu0 0.0
    %578 = vmatpush2.msra.mxu0 0.0
    %579 = vmatprep.subr.mxu0 0.0
    %580 = vmatpush2.msra.mxu0 0.0
    %581 = vmatprep.subr.mxu0 0.0
    %582 = vmatpush2.msra.mxu0 0.0
    %583 = vmatprep.mubr.f32.mxu0 0.0
    %584 = vmatmul.mubr.f32.gmra.mxu0 %v495
    %v585 = vpop.f32.mrf.mxu0
    %v586 = vadd.f32 %v517, %v585
    %v587 = vpop.f32.mrf.mxu0
    %588 = vdwg.mxu0
    %v589 = vmax.f32 %v586, 0.0
    %v590 = vld [vmem:[#allocation8] sm:$0xff]
    %v591 = vld [vmem:[#allocation8 + $0x8] sm:$0xff]
    %v592 = vld [vmem:[#allocation8 + $0x10] sm:$0xff]
    %v593 = vld [vmem:[#allocation8 + $0x18] sm:$0xff]
    %v594 = vld [vmem:[#allocation8 + $0x20] sm:$0xff]
    %v595 = vld [vmem:[#allocation8 + $0x28] sm:$0xff]
    %v596 = vld [vmem:[#allocation8 + $0x30] sm:$0xff]
    %v597 = vld [vmem:[#allocation8 + $0x38] sm:$0xff]
    %v598 = vld [vmem:[#allocation8 + $0x40] sm:$0xff]
    %v599 = vld [vmem:[#allocation8 + $0x48] sm:$0xff]
    %v600 = vld [vmem:[#allocation8 + $0x50] sm:$0xff]
    %v601 = vld [vmem:[#allocation8 + $0x58] sm:$0xff]
    %v602 = vld [vmem:[#allocation8 + $0x60] sm:$0xff]
    %v603 = vld [vmem:[#allocation8 + $0x68] sm:$0xff]
    %v604 = vld [vmem:[#allocation8 + $0x70] sm:$0xff]
    %v605 = vld [vmem:[#allocation8 + $0x78] sm:$0xff]
    %v606 = vld [vmem:[%s6] sm:$0x1]
    %v608 = vlaneseq
    %v609 = vshrl.u32 %v608, 7
    %v610 = vsub.s32 0, %v609
    %v611 = vrot.slane %v606, %v610
    %613 = vmatprep.subr.mxu0 0.0
    %614 = vmatpush1.msra.mxu0 %v605
    %615 = vmatprep.subr.mxu0 0.0
    %616 = vmatpush1.msra.mxu0 %v604
    %617 = vmatprep.subr.mxu0 0.0
    %618 = vmatpush1.msra.mxu0 %v603
    %619 = vmatprep.subr.mxu0 0.0
    %620 = vmatpush1.msra.mxu0 %v602
    %621 = vmatprep.subr.mxu0 0.0
    %622 = vmatpush1.msra.mxu0 %v601
    %623 = vmatprep.subr.mxu0 0.0
    %624 = vmatpush1.msra.mxu0 %v600
    %625 = vmatprep.subr.mxu0 0.0
    %626 = vmatpush1.msra.mxu0 %v599
    %627 = vmatprep.subr.mxu0 0.0
    %628 = vmatpush1.msra.mxu0 %v598
    %629 = vmatprep.subr.mxu0 0.0
    %630 = vmatpush1.msra.mxu0 %v597
    %631 = vmatprep.subr.mxu0 0.0
    %632 = vmatpush1.msra.mxu0 %v596
    %633 = vmatprep.subr.mxu0 0.0
    %634 = vmatpush1.msra.mxu0 %v595
    %635 = vmatprep.subr.mxu0 0.0
    %636 = vmatpush1.msra.mxu0 %v594
    %637 = vmatprep.subr.mxu0 0.0
    %638 = vmatpush1.msra.mxu0 %v593
    %639 = vmatprep.subr.mxu0 0.0
    %640 = vmatpush1.msra.mxu0 %v592
    %641 = vmatprep.subr.mxu0 0.0
    %642 = vmatpush1.msra.mxu0 %v591
    %643 = vmatprep.subr.mxu0 0.0
    %644 = vmatpush1.msra.mxu0 %v590
    %645 = vmatprep.subr.mxu0 0.0
    %646 = vmatpush2.msra.mxu0 0.0
    %647 = vmatprep.subr.mxu0 0.0
    %648 = vmatpush2.msra.mxu0 0.0
    %649 = vmatprep.subr.mxu0 0.0
    %650 = vmatpush2.msra.mxu0 0.0
    %651 = vmatprep.subr.mxu0 0.0
    %652 = vmatpush2.msra.mxu0 0.0
    %653 = vmatprep.subr.mxu0 0.0
    %654 = vmatpush2.msra.mxu0 0.0
    %655 = vmatprep.subr.mxu0 0.0
    %656 = vmatpush2.msra.mxu0 0.0
    %657 = vmatprep.subr.mxu0 0.0
    %658 = vmatpush2.msra.mxu0 0.0
    %659 = vmatprep.subr.mxu0 0.0
    %660 = vmatpush2.msra.mxu0 0.0
    %661 = vmatprep.subr.mxu0 0.0
    %662 = vmatpush2.msra.mxu0 0.0
    %663 = vmatprep.subr.mxu0 0.0
    %664 = vmatpush2.msra.mxu0 0.0
    %665 = vmatprep.subr.mxu0 0.0
    %666 = vmatpush2.msra.mxu0 0.0
    %667 = vmatprep.subr.mxu0 0.0
    %668 = vmatpush2.msra.mxu0 0.0
    %669 = vmatprep.subr.mxu0 0.0
    %670 = vmatpush2.msra.mxu0 0.0
    %671 = vmatprep.subr.mxu0 0.0
    %672 = vmatpush2.msra.mxu0 0.0
    %673 = vmatprep.subr.mxu0 0.0
    %674 = vmatpush2.msra.mxu0 0.0
    %675 = vmatprep.subr.mxu0 0.0
    %676 = vmatpush2.msra.mxu0 0.0
    %677 = vmatprep.mubr.f32.mxu0 0.0
    %678 = vmatmul.mubr.f32.gmra.mxu0 %v589
    %v679 = vpop.f32.mrf.mxu0
    %v680 = vadd.f32 %v611, %v679
    %v681 = vpop.f32.mrf.mxu0
    %682 = vdwg.mxu0
    %v683 = vmax.f32 %v680, 0.0
    %v684 = vld [vmem:[#allocation10] sm:$0xff]
    %v685 = vld [vmem:[#allocation10 + $0x8] sm:$0xff]
    %v686 = vld [vmem:[#allocation10 + $0x10] sm:$0xff]
    %v687 = vld [vmem:[#allocation10 + $0x18] sm:$0xff]
    %v688 = vld [vmem:[#allocation10 + $0x20] sm:$0xff]
    %v689 = vld [vmem:[#allocation10 + $0x28] sm:$0xff]
    %v690 = vld [vmem:[#allocation10 + $0x30] sm:$0xff]
    %v691 = vld [vmem:[#allocation10 + $0x38] sm:$0xff]
    %v692 = vld [vmem:[#allocation10 + $0x40] sm:$0xff]
    %v693 = vld [vmem:[#allocation10 + $0x48] sm:$0xff]
    %v694 = vld [vmem:[#allocation10 + $0x50] sm:$0xff]
    %v695 = vld [vmem:[#allocation10 + $0x58] sm:$0xff]
    %v696 = vld [vmem:[#allocation10 + $0x60] sm:$0xff]
    %v697 = vld [vmem:[#allocation10 + $0x68] sm:$0xff]
    %v698 = vld [vmem:[#allocation10 + $0x70] sm:$0xff]
    %v699 = vld [vmem:[#allocation10 + $0x78] sm:$0xff]
    %v700 = vld [vmem:[%s8] sm:$0x1]
    %v702 = vlaneseq
    %v703 = vshrl.u32 %v702, 7
    %v704 = vsub.s32 0, %v703
    %v705 = vrot.slane %v700, %v704
    %707 = vmatprep.subr.mxu0 0.0
    %708 = vmatpush1.msra.mxu0 %v699
    %709 = vmatprep.subr.mxu0 0.0
    %710 = vmatpush1.msra.mxu0 %v698
    %711 = vmatprep.subr.mxu0 0.0
    %712 = vmatpush1.msra.mxu0 %v697
    %713 = vmatprep.subr.mxu0 0.0
    %714 = vmatpush1.msra.mxu0 %v696
    %715 = vmatprep.subr.mxu0 0.0
    %716 = vmatpush1.msra.mxu0 %v695
    %717 = vmatprep.subr.mxu0 0.0
    %718 = vmatpush1.msra.mxu0 %v694
    %719 = vmatprep.subr.mxu0 0.0
    %720 = vmatpush1.msra.mxu0 %v693
    %721 = vmatprep.subr.mxu0 0.0
    %722 = vmatpush1.msra.mxu0 %v692
    %723 = vmatprep.subr.mxu0 0.0
    %724 = vmatpush1.msra.mxu0 %v691
    %725 = vmatprep.subr.mxu0 0.0
    %726 = vmatpush1.msra.mxu0 %v690
    %727 = vmatprep.subr.mxu0 0.0
    %728 = vmatpush1.msra.mxu0 %v689
    %729 = vmatprep.subr.mxu0 0.0
    %730 = vmatpush1.msra.mxu0 %v688
    %731 = vmatprep.subr.mxu0 0.0
    %732 = vmatpush1.msra.mxu0 %v687
    %733 = vmatprep.subr.mxu0 0.0
    %734 = vmatpush1.msra.mxu0 %v686
    %735 = vmatprep.subr.mxu0 0.0
    %736 = vmatpush1.msra.mxu0 %v685
    %737 = vmatprep.subr.mxu0 0.0
    %738 = vmatpush1.msra.mxu0 %v684
    %739 = vmatprep.subr.mxu0 0.0
    %740 = vmatpush2.msra.mxu0 0.0
    %741 = vmatprep.subr.mxu0 0.0
    %742 = vmatpush2.msra.mxu0 0.0
    %743 = vmatprep.subr.mxu0 0.0
    %744 = vmatpush2.msra.mxu0 0.0
    %745 = vmatprep.subr.mxu0 0.0
    %746 = vmatpush2.msra.mxu0 0.0
    %747 = vmatprep.subr.mxu0 0.0
    %748 = vmatpush2.msra.mxu0 0.0
    %749 = vmatprep.subr.mxu0 0.0
    %750 = vmatpush2.msra.mxu0 0.0
    %751 = vmatprep.subr.mxu0 0.0
    %752 = vmatpush2.msra.mxu0 0.0
    %753 = vmatprep.subr.mxu0 0.0
    %754 = vmatpush2.msra.mxu0 0.0
    %755 = vmatprep.subr.mxu0 0.0
    %756 = vmatpush2.msra.mxu0 0.0
    %757 = vmatprep.subr.mxu0 0.0
    %758 = vmatpush2.msra.mxu0 0.0
    %759 = vmatprep.subr.mxu0 0.0
    %760 = vmatpush2.msra.mxu0 0.0
    %761 = vmatprep.subr.mxu0 0.0
    %762 = vmatpush2.msra.mxu0 0.0
    %763 = vmatprep.subr.mxu0 0.0
    %764 = vmatpush2.msra.mxu0 0.0
    %765 = vmatprep.subr.mxu0 0.0
    %766 = vmatpush2.msra.mxu0 0.0
    %767 = vmatprep.subr.mxu0 0.0
    %768 = vmatpush2.msra.mxu0 0.0
    %769 = vmatprep.subr.mxu0 0.0
    %770 = vmatpush2.msra.mxu0 0.0
    %771 = vmatprep.mubr.f32.mxu0 0.0
    %772 = vmatmul.mubr.f32.gmra.mxu0 %v683
    %v773 = vpop.f32.mrf.mxu0
    %v774 = vadd.f32 %v705, %v773
    %v775 = vpop.f32.mrf.mxu0
    %776 = vdwg.mxu0
    %777 = vst [vmem:[#allocation11] sm:$0xff] %v774
    // Predicated region
    $region58: #{_mlp_forward_impl.1} parent=1 // pred_check
      _
    $region59: #{_mlp_forward_impl.1} parent=1 // pred_check_branch
      %779 = sbr.rel (0) target = $region61
    $region60: #{_mlp_forward_impl.1} parent=1 // pred_region
      %s781 = ssub.s32 128, 128
      %782 = vsyncadd [#allocation4], %s781
      %s784 = sshll.u32 [#allocation11], 4
      %s785 = int_to_ptr.vmem [resolvable:$true] %s784
      %787 = dma.vmem_to_hbm [thread:$0]  %s785, 128, %s9, [#allocation4]
    $region61: #{_mlp_forward_impl.1} parent=1 // pred_fallthru
      _
    // Predicated region
    $region62: #{_mlp_forward_impl.1} parent=1 // pred_check
      _
    $region63: #{_mlp_forward_impl.1} parent=1 // pred_check_branch
      %789 = sbr.rel (0) target = $region65
    $region64: #{_mlp_forward_impl.1} parent=1 // pred_region
      %790 = dma.done [#allocation4], 128
    $region65: #{_mlp_forward_impl.1} parent=1 // pred_fallthru
      _
    %791 = vsyncpa [#allocation3], 1
    %792 = vsyncpa [#allocation6], 1
    %793 = vsyncpa [#allocation9], 1
    %794 = vsyncpa [#allocation4], 1

</llo_original>
